<compile_context>
chip_gen: v5e
topology: v5e:2x2
jax: 0.10.0
libtpu: 0.0.40
codegen_flags: <defaults>
</compile_context>

<pallas_src>
import jax
import jax.numpy as jnp
from jax.experimental import pallas as pl
from jax.experimental.pallas import tpu as pltpu


def _cdiv(a: int, b: int) -> int:
    return (a + b - 1) // b


def _round_up(a: int, b: int) -> int:
    return _cdiv(a, b) * b


def _nconv_kernel(at_ref, x_ref, o_ref):
    # at_ref: (W, V)   -- A^T, resident in VMEM every grid step
    # x_ref : (V, TM)  -- one lane-dense tile of the flattened N*C*L axis
    # o_ref : (W, TM)
    # out[w, m] = sum_v A[v, w] * X'[v, m]; accumulate in f32 on the MXU.
    o_ref[...] = jnp.dot(
        at_ref[...], x_ref[...], preferred_element_type=jnp.float32
    ).astype(o_ref.dtype)


def gwnet_nconv(x, A, *, tile_m: int = 2048):
    """x: (N, C, V, L), A: (V, W) -> (N, C, W, L); matches torch.einsum('ncvl,vw->ncwl')."""
    N, C, V, L = x.shape
    Va, W = A.shape
    assert Va == V, "vertex dims of x and A must match"
    M = N * C * L

    # Lane-dense operand: vertex axis on sublanes, flattened (N,C,L) on lanes.
    # (Single XLA copy; the trailing reshape of the transposed result is free.)
    x_t = jnp.transpose(x, (2, 0, 1, 3)).reshape(V, M)
    # Pre-transpose the tiny adjacency once so the kernel never transposes it.
    a_t = jnp.transpose(A)  # (W, V)

    # Lane-tile selection: multiple of 128, capped by tile_m, and >= 2 grid
    # steps whenever possible (v7x has two TensorCores sharing the grid).
    if M <= 128:
        TM = M  # single block equal to the full dim (always legal)
    else:
        TM = max(128, (min(tile_m, M) // 128) * 128)
        if TM >= M:
            TM = max(128, _round_up(_cdiv(M, 2), 128))
    grid_m = _cdiv(M, TM)  # edge block (if any) is masked by Pallas

    x_bytes = jnp.dtype(x.dtype).itemsize
    a_bytes = jnp.dtype(A.dtype).itemsize
    cost = pl.CostEstimate(
        flops=2 * M * W * V,
        transcendentals=0,
        bytes_accessed=x_bytes * M * (V + W) + a_bytes * V * W,
    )

    out_t = pl.pallas_call(
        _nconv_kernel,
        out_shape=jax.ShapeDtypeStruct((W, M), x.dtype),
        grid_spec=pltpu.PrefetchScalarGridSpec(
            num_scalar_prefetch=0,
            grid=(grid_m,),
            in_specs=[
                # A^T: constant block index -> fetched once, stays resident.
                pl.BlockSpec((W, V), lambda m: (0, 0)),
                # X': one lane-dense tile of the M axis per step.
                pl.BlockSpec((V, TM), lambda m: (0, m)),
            ],
            out_specs=pl.BlockSpec((W, TM), lambda m: (0, m)),
        ),
        compiler_params=pltpu.CompilerParams(
            # Independent lane tiles: megacore-shardable on v7x, harmless on
            # v5e/v6e. (Optional extra: pipeline_mode=pl.Buffered(3) on the
            # streamed specs can recover a few % of exposed DMA on v7x.)
            dimension_semantics=("parallel",),
        ),
        cost_estimate=cost,
    )(a_t, x_t)

    # (W, M) -> (N, C, W, L); matches the module's .contiguous() output.
    return jnp.transpose(out_t.reshape(W, N, C, L), (1, 2, 0, 3))


if __name__ == "__main__":
    # Deterministic small example consistent with the module's forward:
    # x: (batch=2, channels=4, vertices=16, seq_len=16), A: (16, 16)
    key = jax.random.PRNGKey(0)
    kx, ka = jax.random.split(key)
    N, C, V, W, L = 2, 4, 16, 16, 16
    x = jax.random.normal(kx, (N, C, V, L), dtype=jnp.float32)
    A = jax.random.normal(ka, (V, W), dtype=jnp.float32)

    out = jax.block_until_ready(gwnet_nconv(x, A))

    # Sanity check against the pure-JAX reference of the same einsum.
    ref = jnp.einsum("ncvl,vw->ncwl", x, A)
    assert out.shape == (N, C, W, L)
    assert jnp.allclose(out, ref, atol=1e-4, rtol=1e-4)

    print("KERNEL_OK")
</pallas_src>

<mosaic_0001>
module attributes {stable_mosaic.version = 11 : i64} {
  func.func @_nconv_kernel(%arg0: i32, %arg1: memref<16x16xf32, #tpu.memory_space<vmem>>, %arg2: memref<16x128xf32, #tpu.memory_space<vmem>>, %arg3: memref<16x128xf32, #tpu.memory_space<vmem>>) attributes {dimension_semantics = [#tpu.dimension_semantics<parallel>], iteration_bounds = array<i64: 1>, scalar_prefetch = 0 : i64, scratch_operands = 0 : i64, tpu.core_type = #tpu.core_type<tc>, window_params = [{pipeline_mode = #tpu.pipeline_mode<synchronous>, transform_indices = @transform_0, window_bounds = array<i64: 16, 16>}, {transform_indices = @transform_1, window_bounds = array<i64: 16, 128>}, {transform_indices = @transform_2, window_bounds = array<i64: 16, 128>}]} {
    %c0 = arith.constant 0 : index
    %c0_0 = arith.constant 0 : index
    %0 = vector.load %arg1[%c0, %c0_0] : memref<16x16xf32, #tpu.memory_space<vmem>>, vector<16x16xf32>
    %c0_1 = arith.constant 0 : index
    %c0_2 = arith.constant 0 : index
    %1 = vector.load %arg2[%c0_1, %c0_2] : memref<16x128xf32, #tpu.memory_space<vmem>>, vector<16x128xf32>
    %cst = arith.constant dense<0.000000e+00> : vector<16x128xf32>
    %2 = tpu.matmul %0, %1, %cst {dimension_numbers = #tpu.dot_dimension_numbers<[1], [0], [0], [1], [0, 0, 1, 1], [], []>} : vector<16x16xf32>, vector<16x128xf32>, vector<16x128xf32> -> vector<16x128xf32>
    %c0_3 = arith.constant 0 : index
    %c0_4 = arith.constant 0 : index
    %3 = vector.load %arg3[%c0_3, %c0_4] : memref<16x128xf32, #tpu.memory_space<vmem>>, vector<16x128xf32>
    tpu.vector_store %arg3[%c0_3, %c0_4], %2 {strides = array<i32>} : memref<16x128xf32, #tpu.memory_space<vmem>>, vector<16x128xf32>,
    return
  }
  func.func @transform_0(%arg0: i32) -> (i32, i32) {
    %c0_i32 = arith.constant 0 : i32
    %c0_i32_0 = arith.constant 0 : i32
    %c0_i32_1 = arith.constant 0 : i32
    return %c0_i32, %c0_i32_0 : i32, i32
  }
  func.func @transform_1(%arg0: i32) -> (i32, i32) {
    %c0_i32 = arith.constant 0 : i32
    %c0_i32_0 = arith.constant 0 : i32
    return %c0_i32, %arg0 : i32, i32
  }
  func.func @transform_2(%arg0: i32) -> (i32, i32) {
    %c0_i32 = arith.constant 0 : i32
    %c0_i32_0 = arith.constant 0 : i32
    return %c0_i32, %arg0 : i32, i32
  }
}

</mosaic_0001>

<llo_original>
// kernel: tpu_custom_call.1
$region0: #{tpu_custom_call.1}
  #allocation0 [shape = 'u32[]', space=smem, size = 0x4, offset = 0x4, fixed_abs, tag = 'smem constant byte address 0x4 - core index']
  #allocation1 [shape = 'u32[72,128]{1,0:T(1,128)}', space=vmem, size = 0x9000, scoped, tag = 'internal scratch']
  %s0 = inlined_call_operand.hbm [shape: f32[16,16], index: 0, kind: input, shape index: {}]
  %s1 = inlined_call_operand.hbm [shape: f32[16,128], index: 1, kind: input, shape index: {}]
  %s2 = inlined_call_operand.hbm [shape: f32[16,128], index: 2, kind: output, shape index: {}]
  %s3 = sld [smem:[#allocation0]]
  $region26: #{tpu_custom_call.1} parent=0
    _
  %s5 = ssub.s32 1, %s3
  %s6 = scalar_select 0, %s5, %s3
  $region1: #{tpu_custom_call.1} parent=0
    #allocation2 [shape = 'u8[8192]{0}', space=vmem, size = 0x2000, scoped, tag = 'input window, operand 0, single buffered']
    #allocation3 [shape = 's32[1]{0}', space=sflag, size = 0x4, scoped, tag = 'scoped memory for tpu_custom_call.1']
    #allocation4 [shape = 's32[1]{0}', space=sflag, size = 0x4, scoped, tag = 'scoped memory for tpu_custom_call.1']
    #allocation5 [shape = 'u8[8192]{0}', space=vmem, size = 0x2000, scoped, tag = 'input window, operand 1, single buffered']
    #allocation6 [shape = 's32[1]{0}', space=sflag, size = 0x4, scoped, tag = 'scoped memory for tpu_custom_call.1']
    #allocation7 [shape = 'u8[8192]{0}', space=vmem, size = 0x2000, scoped, tag = 'output window, operand 0, single buffered']
    %7 = vsyncpa [#allocation3], 0
    %8 = vsyncpa [#allocation6], 0
    %9 = vsyncpa [#allocation4], 0
    // Predicated region
    $region2: #{tpu_custom_call.1} parent=1 // pred_check
      _
    $region3: #{tpu_custom_call.1} parent=1 // pred_check_branch
      %11 = sbr.rel (0) target = $region5
    $region4: #{tpu_custom_call.1} parent=1 // pred_region
      %13 = vsyncadd [#allocation3], 0
      %s14 = sshll.u32 %s0, 4
      %s15 = int_to_ptr.hbm [resolvable:$true] %s14
      %s16 = sshll.u32 [#allocation2], 4
      %s17 = int_to_ptr.vmem [resolvable:$true] %s16
      %22 = dma.hbm_to_vmem [thread:$0]  %s15, 256, %s17, [#allocation3], 128, 128, 8
    $region5: #{tpu_custom_call.1} parent=1 // pred_fallthru
      _
    // Predicated region
    $region6: #{tpu_custom_call.1} parent=1 // pred_check
      _
    $region7: #{tpu_custom_call.1} parent=1 // pred_check_branch
      %24 = sbr.rel (0) target = $region9
    $region8: #{tpu_custom_call.1} parent=1 // pred_region
      %26 = vsyncadd [#allocation6], 0
      %s27 = sshll.u32 %s1, 4
      %s28 = int_to_ptr.hbm [resolvable:$true] %s27
      %s29 = sshll.u32 [#allocation5], 4
      %s30 = int_to_ptr.vmem [resolvable:$true] %s29
      %35 = dma.hbm_to_vmem [thread:$0]  %s28, 256, %s30, [#allocation6], 128, 128, 8
    $region9: #{tpu_custom_call.1} parent=1 // pred_fallthru
      _
    // Predicated region
    $region10: #{tpu_custom_call.1} parent=1 // pred_check
      _
    $region11: #{tpu_custom_call.1} parent=1 // pred_check_branch
      %37 = sbr.rel (0) target = $region13
    $region12: #{tpu_custom_call.1} parent=1 // pred_region
      %39 = dma.done [#allocation3], 256
    $region13: #{tpu_custom_call.1} parent=1 // pred_fallthru
      _
    // Predicated region
    $region14: #{tpu_custom_call.1} parent=1 // pred_check
      _
    $region15: #{tpu_custom_call.1} parent=1 // pred_check_branch
      %41 = sbr.rel (0) target = $region17
    $region16: #{tpu_custom_call.1} parent=1 // pred_region
      %43 = dma.done [#allocation6], 256
    $region17: #{tpu_custom_call.1} parent=1 // pred_fallthru
      _
    %v44 = vld [vmem:[#allocation2] sm:$0xff]
    %v45 = vld [vmem:[#allocation2 + $0x8] sm:$0xff]
    %v46 = vld [vmem:[#allocation5] sm:$0xff]
    %v47 = vld [vmem:[#allocation5 + $0x8] sm:$0xff]
    %vm48 = vcmask 130048
    %v50 = vsel %vm48, %v44, 0
    %v53 = vsel %vm48, %v45, 0
    %55 = vmatpush.msra.mxu0 0.0
    %56 = vmatpush.msra.mxu0 0.0
    %57 = vmatpush.msra.mxu0 0.0
    %58 = vmatpush.msra.mxu0 0.0
    %59 = vmatpush.msra.mxu0 0.0
    %60 = vmatpush.msra.mxu0 0.0
    %61 = vmatpush.msra.mxu0 0.0
    %62 = vmatpush.msra.mxu0 0.0
    %63 = vmatpush.msra.mxu0 0.0
    %64 = vmatpush.msra.mxu0 0.0
    %65 = vmatpush.msra.mxu0 0.0
    %66 = vmatpush.msra.mxu0 0.0
    %67 = vmatpush.msra.mxu0 0.0
    %68 = vmatpush.msra.mxu0 0.0
    %69 = vmatpush.msra.mxu0 %v47
    %70 = vmatpush.msra.mxu0 %v46
    %71 = vmatmul.f32.gmra.mxu0 %v50
    %v72 = vpop.f32.mrf.mxu0
    %v73 = vadd.f32 0.0, %v72
    %74 = vmatmul.f32.gmra.mxu0 %v53
    %v75 = vpop.f32.mrf.mxu0
    %v76 = vadd.f32 0.0, %v75
    %77 = vdwg.mxu0
    %78 = vst [vmem:[#allocation7] sm:$0xff] %v73
    %79 = vst [vmem:[#allocation7 + $0x8] sm:$0xff] %v76
    // Predicated region
    $region18: #{tpu_custom_call.1} parent=1 // pred_check
      _
    $region19: #{tpu_custom_call.1} parent=1 // pred_check_branch
      %81 = sbr.rel (0) target = $region21
    $region20: #{tpu_custom_call.1} parent=1 // pred_region
      %83 = vsyncadd [#allocation4], 0
      %s84 = sshll.u32 [#allocation7], 4
      %s85 = int_to_ptr.vmem [resolvable:$true] %s84
      %s86 = sshll.u32 %s2, 4
      %s87 = int_to_ptr.hbm [resolvable:$true] %s86
      %92 = dma.vmem_to_hbm [thread:$0]  %s85, 256, %s87, [#allocation4], 128, 128, 8
    $region21: #{tpu_custom_call.1} parent=1 // pred_fallthru
      _
    // Predicated region
    $region22: #{tpu_custom_call.1} parent=1 // pred_check
      _
    $region23: #{tpu_custom_call.1} parent=1 // pred_check_branch
      %94 = sbr.rel (0) target = $region25
    $region24: #{tpu_custom_call.1} parent=1 // pred_region
      %96 = dma.done [#allocation4], 256
    $region25: #{tpu_custom_call.1} parent=1 // pred_fallthru
      _
    %97 = vsyncpa [#allocation3], 1
    %98 = vsyncpa [#allocation6], 1
    %99 = vsyncpa [#allocation4], 1

</llo_original>
